<compile_context>
chip_gen: v6e
topology: v6e:2x2x1
jax: 0.10.0
libtpu: 0.0.40
codegen_flags: <defaults>
</compile_context>

<pallas_src>
import functools
import math

import jax
import jax.numpy as jnp
from jax.experimental import pallas as pl
from jax.experimental.pallas import tpu as pltpu

_LANE = 128
_SUB = 16                      # block-row alignment for the multi-block path
_LN2 = math.log(2.0)


def _weighted_bce_ual_kernel(x_ref, t_ref, bce_ref, ual_ref, *,
                             pos_weight, block_rows, blocks_per_core,
                             num_blocks, valid_rows_last, gate_tail):
    """One grid step: fold one (block_rows, 128) tile into this core's sums.

    x_ref:   VMEM [block_rows, 128]  logits tile (source dtype)
    t_ref:   VMEM [block_rows, 128]  targets tile (source dtype)
    bce_ref: VMEM f32[8, 128]        this core's running BCE partial sums
    ual_ref: VMEM f32[8, 128]        this core's running UAL partial sums
    """
    c = pl.program_id(0)            # TensorCore split axis ("parallel")
    j = pl.program_id(1)            # reduction axis ("arbitrary")
    blk = c * blocks_per_core + j   # global row-block index
    mask_last = valid_rows_last != block_rows   # static: last block is partial

    @pl.when(j == 0)
    def _init():
        bce_ref[...] = jnp.zeros_like(bce_ref)
        ual_ref[...] = jnp.zeros_like(ual_ref)

    def _accumulate(apply_row_mask):
        x = x_ref[...].astype(jnp.float32)
        t = t_ref[...].astype(jnp.float32)
        if apply_row_mask:
            # Rows >= valid_rows_last of the partial boundary block are
            # out-of-bounds garbage: zero them.  A (x=0, t=0) element then
            # contributes exactly ln2 / 1.0, removed analytically in the
            # wrapper (no per-element output masking needed).
            rid = jax.lax.broadcasted_iota(jnp.int32, (block_rows, _LANE), 0)
            keep = rid < valid_rows_last
            x = jnp.where(keep, x, 0.0)
            t = jnp.where(keep, t, 0.0)

        nx = -x
        e = jnp.exp(jnp.minimum(x, nx))                  # exp(-|x|)     (EUP)
        sp_neg_x = jnp.maximum(nx, 0.0) + jnp.log1p(e)   # softplus(-x), stable
        one_m_t = 1.0 - t
        if pos_weight == 1.0:    # static specialization: coefficient == 1
            bce = one_m_t * x + sp_neg_x
        else:
            # BCEWithLogits(pos_weight p): (1-t)*x + (p*t + 1 - t)*softplus(-x)
            bce = one_m_t * x + (pos_weight * t + one_m_t) * sp_neg_x

        # uncertainty = 1 - (2*sigmoid(x)-1)^2 = 1 - tanh(x/2)^2  (exact; tanh
        # rides the EUP slot instead of a VALU reciprocal/NR chain).
        th = jnp.tanh(0.5 * x)
        unc = 1.0 - th * th
        ual = unc * unc

        # Per-block partial reduction into the resident (8,128) accumulators.
        # The reshape splits the sublane-major axis on an (8,128) tile boundary
        # so it lowers to pure vreg adds (no relayout / VMEM copy); the single
        # cross-lane reduce is deferred to the wrapper.
        if block_rows % 8 == 0:
            bce_ref[...] += bce.reshape(block_rows // 8, 8, _LANE).sum(axis=0)
            ual_ref[...] += ual.reshape(block_rows // 8, 8, _LANE).sum(axis=0)
        else:
            # Tiny single-block case (block_rows < 8): add into the first
            # block_rows sublanes of the accumulator.
            bce_ref[0:block_rows, :] += bce
            ual_ref[0:block_rows, :] += ual

    if mask_last or gate_tail:
        @pl.when(blk < num_blocks - 1)
        def _full_blocks():
            _accumulate(False)

        # Redundant tail blocks (blk >= num_blocks, from rounding the block
        # count up to a multiple of the core count) fall through both whens
        # and are skipped entirely.
        @pl.when(blk == num_blocks - 1)
        def _last_block():
            _accumulate(mask_last)
    else:
        _accumulate(False)


@functools.partial(
    jax.jit,
    static_argnames=("pos_weight", "neg_weight", "lambda_ual", "max_block_rows"))
def weighted_bce_loss(logits, targets, pos_weight=1.0, neg_weight=5.0,
                      lambda_ual=1.0, max_block_rows=8192):
    """mean(BCEWithLogits(pos_weight)) + lambda_ual * mean((1-(2p-1)^2)^2).

    Inputs may be bf16 (recommended for mem-bound v5e/v6e; binary targets cast
    to bf16 are exact); all math is done in f32 per tile inside the kernel.
    """
    del neg_weight  # defined in the PyTorch module but never used in forward()

    x = logits.reshape(-1)   # keep source dtype; cast happens per-tile in-kernel
    t = targets.reshape(-1)
    n = x.shape[0]
    if n == 0:               # static shape -> static early-out, avoids 0/0
        return jnp.float32(0.0)

    # ---- lane geometry: (rows, 128) lane-dense slab --------------------------
    rows = -(-n // _LANE)                 # ceil(n / 128)
    pad_lane = rows * _LANE - n
    if pad_lane:
        # Ragged tail only (<128 real pad elements). jnp.pad would copy, so ask
        # XLA to fuse it into the custom call via allow_input_fusion below.
        x = jnp.pad(x, (0, pad_lane))
        t = jnp.pad(t, (0, pad_lane))
    x2 = x.reshape(rows, _LANE)           # free bitcast when pad_lane == 0
    t2 = t.reshape(rows, _LANE)

    # ---- block geometry -------------------------------------------------------
    max_block_rows = max(_SUB, (int(max_block_rows) // _SUB) * _SUB)
    if rows <= max_block_rows:
        # Single-ish block: bm == rows (exact fit, "full array dim" rule) or the
        # largest multiple of 8 <= rows (leaves a tiny masked second block).
        bm = rows if (rows < 8 or rows % 8 == 0) else (rows // 8) * 8
    else:
        bm = max_block_rows               # multiple of 16; last block may be partial
    num_blocks = -(-rows // bm)
    valid_rows_last = rows - (num_blocks - 1) * bm   # valid rows in last block

    ncores = 2 if num_blocks >= 2 else 1     # v7x TensorCore split; no-op on 1-TC
    bpc = -(-num_blocks // ncores)           # row-blocks per core (grid axis 1)
    gate_tail = (ncores * bpc != num_blocks)  # at most 1 clamped+gated block

    def in_index_map(c_, j_):
        blk = c_ * bpc + j_
        if gate_tail:
            blk = jnp.minimum(blk, num_blocks - 1)   # clamp redundant tail block
        return (blk, 0)

    kernel = functools.partial(
        _weighted_bce_ual_kernel, pos_weight=float(pos_weight), block_rows=bm,
        blocks_per_core=bpc, num_blocks=num_blocks,
        valid_rows_last=valid_rows_last, gate_tail=gate_tail)

    covered = num_blocks * bm * _LANE   # elements folded into the partial sums
    bytes_in = covered * (x2.dtype.itemsize + t2.dtype.itemsize)

    # TODO(synk): for extremely large n, per-block partial slabs (or Kahan)
    # would tighten parity with a pure f32-mean reference; fine for a loss.
    bce_part, ual_part = pl.pallas_call(
        kernel,
        out_shape=(jax.ShapeDtypeStruct((ncores, 8, _LANE), jnp.float32),
                   jax.ShapeDtypeStruct((ncores, 8, _LANE), jnp.float32)),
        grid_spec=pltpu.PrefetchScalarGridSpec(
            num_scalar_prefetch=0,
            grid=(ncores, bpc),
            in_specs=[pl.BlockSpec((bm, _LANE), in_index_map),
                      pl.BlockSpec((bm, _LANE), in_index_map)],
            out_specs=[pl.BlockSpec((None, 8, _LANE), lambda c_, j_: (c_, 0, 0)),
                       pl.BlockSpec((None, 8, _LANE), lambda c_, j_: (c_, 0, 0))],
        ),
        compiler_params=pltpu.CompilerParams(
            dimension_semantics=("parallel", "arbitrary"),
            vmem_limit_bytes=32 * 1024 * 1024,
            allow_input_fusion=[True, True] if pad_lane else None,
        ),
        cost_estimate=pl.CostEstimate(
            flops=17 * covered,
            transcendentals=3 * covered,
            bytes_accessed=int(bytes_in) + 2 * ncores * 8 * _LANE * 4,
        ),
    )(x2, t2)

    # Final tiny reduction. Every accumulated non-real element was exactly
    # (x=0, t=0): ln(2) to the BCE sum, 1.0 to the UAL sum (pos_weight
    # independent) -> subtract analytically, then normalize by the true n.
    extra = jnp.float32(covered - n)
    bce_sum = jnp.sum(bce_part) - extra * jnp.float32(_LN2)
    ual_sum = jnp.sum(ual_part) - extra
    n_f = jnp.float32(n)
    return bce_sum / n_f + jnp.float32(lambda_ual) * (ual_sum / n_f)


def _reference_loss(logits, targets, pos_weight=1.0, lambda_ual=1.0):
    x = logits.astype(jnp.float32)
    t = targets.astype(jnp.float32)
    sp_neg_x = jnp.maximum(-x, 0.0) + jnp.log1p(jnp.exp(-jnp.abs(x)))
    bce = (1.0 - t) * x + (pos_weight * t + (1.0 - t)) * sp_neg_x
    probs = jax.nn.sigmoid(x)
    uncertainty = 1.0 - jnp.abs((2.0 * probs - 1.0) ** 2)
    ual = jnp.mean(uncertainty ** 2)
    return jnp.mean(bce) + lambda_ual * ual


if __name__ == "__main__":
    key = jax.random.PRNGKey(0)
    k1, k2, k3, k4 = jax.random.split(key, 4)

    def _check(lg, tg, **kw):
        got = jax.block_until_ready(weighted_bce_loss(lg, tg, **kw))
        want = _reference_loss(lg, tg, pos_weight=kw.get("pos_weight", 1.0),
                               lambda_ual=kw.get("lambda_ual", 1.0))
        assert jnp.allclose(got, want, rtol=1e-4, atol=1e-5), (got, want, kw)

    # 1) Base NCHW case (2,4,16,16) f32: single exact block, pos_weight==1 path,
    #    no padding of any kind (pure reshape, zero extra HBM traffic).
    lg = jax.random.normal(k1, (2, 4, 16, 16), dtype=jnp.float32)
    tg = (jax.random.uniform(k2, (2, 4, 16, 16)) > 0.5).astype(jnp.float32)
    _check(lg, tg, pos_weight=1.0, neg_weight=5.0, lambda_ual=1.0)

    # 2) Ragged element count + pos_weight != 1: small lane pad, partial last
    #    row-block handled by the in-kernel row mask, 2 blocks on the core axis.
    lg2 = jax.random.normal(k3, (3, 5, 17, 13), dtype=jnp.float32)
    tg2 = (jax.random.uniform(k4, (3, 5, 17, 13)) > 0.5).astype(jnp.float32)
    _check(lg2, tg2, pos_weight=2.0, neg_weight=5.0, lambda_ual=0.5)

    # 3) Multi-block pipelined grid with bf16 logits AND bf16 targets (halved
    #    HBM bytes; per-tile f32 cast in-kernel), dual-core split grid (2, 2).
    lg3 = jax.random.normal(k1, (2, 4, 32, 32), dtype=jnp.bfloat16)
    tg3 = (jax.random.uniform(k2, (2, 4, 32, 32)) > 0.5).astype(jnp.bfloat16)
    _check(lg3, tg3, pos_weight=1.0, neg_weight=5.0, lambda_ual=1.0,
           max_block_rows=16)

    # 4) Ragged + partial last block + odd block count: exercises the clamped,
    #    pl.when-gated redundant grid step on the 2-core split.
    lg4 = jax.random.normal(k3, (2, 3, 13, 65), dtype=jnp.float32)
    tg4 = (jax.random.uniform(k4, (2, 3, 13, 65)) > 0.5).astype(jnp.float32)
    _check(lg4, tg4, pos_weight=3.0, neg_weight=1.0, lambda_ual=2.0,
           max_block_rows=16)

    # 5) Tiny input (< 8 rows of 128): sub-8-row accumulate path.
    lg5 = jax.random.normal(k1, (4, 50), dtype=jnp.float32)
    tg5 = (jax.random.uniform(k2, (4, 50)) > 0.5).astype(jnp.float32)
    _check(lg5, tg5, pos_weight=1.5, neg_weight=5.0, lambda_ual=1.0)

    print("KERNEL_OK")
</pallas_src>

<mosaic_0001>
module attributes {stable_mosaic.version = 11 : i64} {
  func.func @_weighted_bce_ual_kernel(%arg0: i32, %arg1: i32, %arg2: memref<16x128xf32, #tpu.memory_space<vmem>>, %arg3: memref<16x128xf32, #tpu.memory_space<vmem>>, %arg4: memref<1x8x128xf32, #tpu.memory_space<vmem>>, %arg5: memref<1x8x128xf32, #tpu.memory_space<vmem>>) attributes {dimension_semantics = [#tpu.dimension_semantics<parallel>, #tpu.dimension_semantics<arbitrary>], iteration_bounds = array<i64: 1, 1>, scalar_prefetch = 0 : i64, scratch_operands = 0 : i64, tpu.core_type = #tpu.core_type<tc>, window_params = [{transform_indices = @transform_0, window_bounds = array<i64: 16, 128>}, {transform_indices = @transform_1, window_bounds = array<i64: 16, 128>}, {transform_indices = @transform_2, window_bounds = array<i64: 1, 8, 128>}, {transform_indices = @transform_3, window_bounds = array<i64: 1, 8, 128>}]} {
    %c0_i32 = arith.constant 0 : i32
    %0 = arith.cmpi eq, %arg1, %c0_i32 : i32
    %1 = arith.extui %0 : i1 to i32
    %c0_i32_0 = arith.constant 0 : i32
    %2 = arith.cmpi ne, %1, %c0_i32_0 : i32
    scf.if %2 {
      %cst_22 = arith.constant 0.000000e+00 : f32
      %40 = vector.broadcast %cst_22 : f32 to vector<8x128xf32>
      %c0_23 = arith.constant 0 : index
      %c0_24 = arith.constant 0 : index
      %c0_25 = arith.constant 0 : index
      %41 = vector.load %arg4[%c0_23, %c0_24, %c0_25] : memref<1x8x128xf32, #tpu.memory_space<vmem>>, vector<1x8x128xf32>
      %42 = vector.shape_cast %41 : vector<1x8x128xf32> to vector<8x128xf32>
      %43 = vector.shape_cast %40 : vector<8x128xf32> to vector<1x8x128xf32>
      tpu.vector_store %arg4[%c0_23, %c0_24, %c0_25], %43 {strides = array<i32>} : memref<1x8x128xf32, #tpu.memory_space<vmem>>, vector<1x8x128xf32>,
      %cst_26 = arith.constant 0.000000e+00 : f32
      %44 = vector.broadcast %cst_26 : f32 to vector<8x128xf32>
      %c0_27 = arith.constant 0 : index
      %c0_28 = arith.constant 0 : index
      %c0_29 = arith.constant 0 : index
      %45 = vector.load %arg5[%c0_27, %c0_28, %c0_29] : memref<1x8x128xf32, #tpu.memory_space<vmem>>, vector<1x8x128xf32>
      %46 = vector.shape_cast %45 : vector<1x8x128xf32> to vector<8x128xf32>
      %47 = vector.shape_cast %44 : vector<8x128xf32> to vector<1x8x128xf32>
      tpu.vector_store %arg5[%c0_27, %c0_28, %c0_29], %47 {strides = array<i32>} : memref<1x8x128xf32, #tpu.memory_space<vmem>>, vector<1x8x128xf32>,
    } else {
    }
    %c0 = arith.constant 0 : index
    %c0_1 = arith.constant 0 : index
    %3 = vector.load %arg2[%c0, %c0_1] : memref<16x128xf32, #tpu.memory_space<vmem>>, vector<16x128xf32>
    %c0_2 = arith.constant 0 : index
    %c0_3 = arith.constant 0 : index
    %4 = vector.load %arg3[%c0_2, %c0_3] : memref<16x128xf32, #tpu.memory_space<vmem>>, vector<16x128xf32>
    %cst = arith.constant 0.000000e+00 : f32
    %5 = vector.broadcast %cst : f32 to vector<16x128xf32>
    %6 = arith.subf %5, %3 : vector<16x128xf32>
    %7 = arith.minimumf %3, %6 : vector<16x128xf32>
    %8 = math.exp %7 : vector<16x128xf32>
    %cst_4 = arith.constant 0.000000e+00 : f32
    %9 = vector.broadcast %cst_4 : f32 to vector<16x128xf32>
    %10 = arith.maximumf %6, %9 : vector<16x128xf32>
    %11 = math.log1p %8 : vector<16x128xf32>
    %12 = arith.addf %10, %11 : vector<16x128xf32>
    %cst_5 = arith.constant 1.000000e+00 : f32
    %13 = vector.broadcast %cst_5 : f32 to vector<16x128xf32>
    %14 = arith.subf %13, %4 : vector<16x128xf32>
    %15 = arith.mulf %14, %3 : vector<16x128xf32>
    %16 = arith.addf %15, %12 : vector<16x128xf32>
    %cst_6 = arith.constant 5.000000e-01 : f32
    %17 = vector.broadcast %cst_6 : f32 to vector<16x128xf32>
    %18 = arith.mulf %17, %3 : vector<16x128xf32>
    %19 = math.tanh %18 : vector<16x128xf32>
    %20 = arith.mulf %19, %19 : vector<16x128xf32>
    %cst_7 = arith.constant 1.000000e+00 : f32
    %21 = vector.broadcast %cst_7 : f32 to vector<16x128xf32>
    %22 = arith.subf %21, %20 : vector<16x128xf32>
    %23 = arith.mulf %22, %22 : vector<16x128xf32>
    %c0_8 = arith.constant 0 : index
    %c0_9 = arith.constant 0 : index
    %c0_10 = arith.constant 0 : index
    %24 = vector.load %arg4[%c0_8, %c0_9, %c0_10] : memref<1x8x128xf32, #tpu.memory_space<vmem>>, vector<1x8x128xf32>
    %25 = vector.shape_cast %24 : vector<1x8x128xf32> to vector<8x128xf32>
    %26 = vector.shape_cast %16 : vector<16x128xf32> to vector<2x8x128xf32>
    %cst_11 = arith.constant dense<0.000000e+00> : vector<8x128xf32>
    %27 = vector.multi_reduction <add>, %26, %cst_11 [0] : vector<2x8x128xf32> to vector<8x128xf32>
    %28 = arith.addf %25, %27 : vector<8x128xf32>
    %c0_12 = arith.constant 0 : index
    %c0_13 = arith.constant 0 : index
    %c0_14 = arith.constant 0 : index
    %29 = vector.load %arg4[%c0_12, %c0_13, %c0_14] : memref<1x8x128xf32, #tpu.memory_space<vmem>>, vector<1x8x128xf32>
    %30 = vector.shape_cast %29 : vector<1x8x128xf32> to vector<8x128xf32>
    %31 = vector.shape_cast %28 : vector<8x128xf32> to vector<1x8x128xf32>
    tpu.vector_store %arg4[%c0_12, %c0_13, %c0_14], %31 {strides = array<i32>} : memref<1x8x128xf32, #tpu.memory_space<vmem>>, vector<1x8x128xf32>,
    %c0_15 = arith.constant 0 : index
    %c0_16 = arith.constant 0 : index
    %c0_17 = arith.constant 0 : index
    %32 = vector.load %arg5[%c0_15, %c0_16, %c0_17] : memref<1x8x128xf32, #tpu.memory_space<vmem>>, vector<1x8x128xf32>
    %33 = vector.shape_cast %32 : vector<1x8x128xf32> to vector<8x128xf32>
    %34 = vector.shape_cast %23 : vector<16x128xf32> to vector<2x8x128xf32>
    %cst_18 = arith.constant dense<0.000000e+00> : vector<8x128xf32>
    %35 = vector.multi_reduction <add>, %34, %cst_18 [0] : vector<2x8x128xf32> to vector<8x128xf32>
    %36 = arith.addf %33, %35 : vector<8x128xf32>
    %c0_19 = arith.constant 0 : index
    %c0_20 = arith.constant 0 : index
    %c0_21 = arith.constant 0 : index
    %37 = vector.load %arg5[%c0_19, %c0_20, %c0_21] : memref<1x8x128xf32, #tpu.memory_space<vmem>>, vector<1x8x128xf32>
    %38 = vector.shape_cast %37 : vector<1x8x128xf32> to vector<8x128xf32>
    %39 = vector.shape_cast %36 : vector<8x128xf32> to vector<1x8x128xf32>
    tpu.vector_store %arg5[%c0_19, %c0_20, %c0_21], %39 {strides = array<i32>} : memref<1x8x128xf32, #tpu.memory_space<vmem>>, vector<1x8x128xf32>,
    return
  }
  func.func @transform_0(%arg0: i32, %arg1: i32) -> (i32, i32) {
    %c1_i32 = arith.constant 1 : i32
    %0 = arith.muli %arg0, %c1_i32 : i32
    %1 = arith.addi %0, %arg1 : i32
    %c0_i32 = arith.constant 0 : i32
    %c0_i32_0 = arith.constant 0 : i32
    return %1, %c0_i32 : i32, i32
  }
  func.func @transform_1(%arg0: i32, %arg1: i32) -> (i32, i32) {
    %c1_i32 = arith.constant 1 : i32
    %0 = arith.muli %arg0, %c1_i32 : i32
    %1 = arith.addi %0, %arg1 : i32
    %c0_i32 = arith.constant 0 : i32
    %c0_i32_0 = arith.constant 0 : i32
    return %1, %c0_i32 : i32, i32
  }
  func.func @transform_2(%arg0: i32, %arg1: i32) -> (i32, i32, i32) {
    %c0_i32 = arith.constant 0 : i32
    %c0_i32_0 = arith.constant 0 : i32
    %c0_i32_1 = arith.constant 0 : i32
    return %arg0, %c0_i32, %c0_i32_0 : i32, i32, i32
  }
  func.func @transform_3(%arg0: i32, %arg1: i32) -> (i32, i32, i32) {
    %c0_i32 = arith.constant 0 : i32
    %c0_i32_0 = arith.constant 0 : i32
    %c0_i32_1 = arith.constant 0 : i32
    return %arg0, %c0_i32, %c0_i32_0 : i32, i32, i32
  }
}

</mosaic_0001>

<llo_original>
// kernel: weighted_bce_loss.1
$region0: #{weighted_bce_loss.1}
  #allocation0 [shape = 'u32[]', space=smem, size = 0x4, offset = 0x4, fixed_abs, tag = 'smem constant byte address 0x4 - core index']
  #allocation1 [shape = 'u32[144,128]{1,0:T(1,128)}', space=vmem, size = 0x12000, scoped, tag = 'internal scratch']
  %s0 = inlined_call_operand.vmem [shape: f32[16,128], index: 0, kind: input, shape index: {}]
  %s1 = inlined_call_operand.vmem [shape: f32[16,128], index: 1, kind: input, shape index: {}]
  %s2 = inlined_call_operand.vmem [shape: f32[1,8,128], index: 2, kind: output, shape index: {0}]
  %s3 = inlined_call_operand.vmem [shape: f32[1,8,128], index: 3, kind: output, shape index: {1}]
  %4 = xla_tuple %s2, %s3
  %s5 = sld [smem:[#allocation0]]
  $region30: #{weighted_bce_loss.1} parent=0
    _
  %s7 = ssub.s32 1, %s5
  %s8 = scalar_select 0, %s7, %s5
  // Predicated region
  $region2: #{weighted_bce_loss.1} parent=0 // pred_check
    _
  $region3: #{weighted_bce_loss.1} parent=0 // pred_check_branch
    %10 = sbr.rel (0) target = $region5
  $region4: #{weighted_bce_loss.1} parent=0 // pred_region
    %s11 = sadd.s32 0, 0
    %s12 = smul.u32 2, %s11
    %p13 = scmp.lt.s32.totalorder %s12, 1
    %s14 = scalar_select %p13, %s12, 1
    %s15 = smul.addr %s14, 8
    %s16 = scalar_lea.vmem %s0, %s15
    %s17 = sadd.s32 0, 0
    %s18 = smul.u32 2, %s17
  $region5: #{weighted_bce_loss.1} parent=0 // pred_fallthru
    _
  // Predicated region
  $region6: #{weighted_bce_loss.1} parent=0 // pred_check
    _
  $region7: #{weighted_bce_loss.1} parent=0 // pred_check_branch
    %20 = sbr.rel (0) target = $region9
  $region8: #{weighted_bce_loss.1} parent=0 // pred_region
    %s21 = sadd.s32 0, 0
    %s22 = smul.u32 2, %s21
    %p23 = scmp.lt.s32.totalorder %s22, 1
    %s24 = scalar_select %p23, %s22, 1
    %s25 = smul.addr %s24, 8
    %s26 = scalar_lea.vmem %s1, %s25
    %s27 = sadd.s32 0, 0
    %s28 = smul.u32 2, %s27
  $region9: #{weighted_bce_loss.1} parent=0 // pred_fallthru
    _
  %s29 = sadd.s32 0, 0
  %s30 = smul.u32 2, %s29
  %p31 = scmp.lt.s32.totalorder %s30, 1
  %s32 = scalar_select %p31, %s30, 1
  %s33 = smul.addr %s32, 8
  %s34 = scalar_lea.vmem %s0, %s33
  %s35 = sadd.s32 0, 0
  %s36 = smul.u32 2, %s35
  %p37 = scmp.lt.s32.totalorder %s36, 1
  %s38 = scalar_select %p37, %s36, 1
  %s39 = smul.addr %s38, 8
  %s40 = scalar_lea.vmem %s1, %s39
  %s41 = sadd.s32 0, 0
  %s42 = smul.u32 2, %s41
  %p43 = scmp.lt.s32.totalorder %s42, 1
  %s44 = scalar_select %p43, %s42, 1
  %s45 = smul.addr %s44, 8
  %s46 = scalar_lea.vmem %s0, %s45
  %s47 = sadd.s32 0, 0
  %s48 = smul.u32 2, %s47
  %s49 = sadd.s32 0, 0
  %s50 = smul.u32 2, %s49
  %p51 = scmp.lt.s32.totalorder %s50, 1
  %s52 = scalar_select %p51, %s50, 1
  %s53 = smul.addr %s52, 8
  %s54 = scalar_lea.vmem %s1, %s53
  %s55 = sadd.s32 0, 0
  %s56 = smul.u32 2, %s55
  %p57 = scmp.eq.s32.totalorder 0, 0
  // Predicated region
  $region10: #{weighted_bce_loss.1} parent=0 // pred_check
    %p58 = pneg %p57
  $region11: #{weighted_bce_loss.1} parent=0 // pred_check_branch
    %60 = sbr.rel (%p58) target = $region13
  $region12: #{weighted_bce_loss.1} parent=0 // pred_region
    %61 = vst [vmem:[%s2] sm:$0xff] 0.0
    %62 = vst [vmem:[%s3] sm:$0xff] 0.0
  $region13: #{weighted_bce_loss.1} parent=0 // pred_fallthru
    _
  %v63 = vld [vmem:[%s46] sm:$0xff]
  %v64 = vld [vmem:[%s46 + $0x8] sm:$0xff]
  %v65 = vld [vmem:[%s54] sm:$0xff]
  %v66 = vld [vmem:[%s54 + $0x8] sm:$0xff]
  %v67 = vsub.f32 0.0, %v63
  %v68 = vsub.f32 0.0, %v64
  %v69 = vmin.f32 %v63, %v67
  %v70 = vmin.f32 %v64, %v68
  %v71 = vmul.f32 %v69, 1.442695
  %v72 = vpow.pop %v71
  %v73 = vmul.f32 %v70, 1.442695
  %v74 = vpow.pop %v73
  %v75 = vmax.f32 %v67, 0.0
  %v76 = vmax.f32 %v68, 0.0
  %v77 = vadd.f32 %v72, 1.0
  %v78 = vlog2.pop %v77
  %v79 = vmul.f32 %v78, 0.6931472
  %v80 = vmul.f32 -0.5, %v72
  %v81 = vadd.f32 %v80, 1.0
  %v82 = vmul.f32 %v81, %v72
  %v83 = vand.u32 2147483647, %v72
  %vm84 = vcmp.lt.f32.partialorder %v83, 0.0004427343
  %v85 = vsel %vm84, %v82, %v79
  %v86 = vadd.f32 %v74, 1.0
  %v87 = vlog2.pop %v86
  %v88 = vmul.f32 %v87, 0.6931472
  %v89 = vmul.f32 -0.5, %v74
  %v90 = vadd.f32 %v89, 1.0
  %v91 = vmul.f32 %v90, %v74
  %v92 = vand.u32 2147483647, %v74
  %vm93 = vcmp.lt.f32.partialorder %v92, 0.0004427343
  %v94 = vsel %vm93, %v91, %v88
  %v95 = vadd.f32 %v75, %v85
  %v96 = vadd.f32 %v76, %v94
  %v97 = vsub.f32 1.0, %v65
  %v98 = vsub.f32 1.0, %v66
  %v99 = vmul.f32 %v97, %v63
  %v100 = vmul.f32 %v98, %v64
  %v101 = vadd.f32 %v99, %v95
  %v102 = vadd.f32 %v100, %v96
  %v103 = vmul.f32 %v63, 0.5
  %v104 = vmul.f32 %v64, 0.5
  %v105 = vtanh.pop %v103
  %v106 = vtanh.pop %v104
  %v107 = vmul.f32 %v105, %v105
  %v108 = vmul.f32 %v106, %v106
  %v109 = vsub.f32 1.0, %v107
  %v110 = vsub.f32 1.0, %v108
  %v111 = vmul.f32 %v109, %v109
  %v112 = vmul.f32 %v110, %v110
  %v113 = vld [vmem:[%s2] sm:$0xff]
  %v114 = vadd.f32 %v101, %v102
  %v115 = vadd.f32 %v113, %v114
  %116 = vst [vmem:[%s2] sm:$0xff] %v115
  %v117 = vld [vmem:[%s3] sm:$0xff]
  %v118 = vadd.f32 %v111, %v112
  %v119 = vadd.f32 %v117, %v118
  %120 = vst [vmem:[%s3] sm:$0xff] %v119
  // Predicated region
  $region14: #{weighted_bce_loss.1} parent=0 // pred_check
    _
  $region15: #{weighted_bce_loss.1} parent=0 // pred_check_branch
    %122 = sbr.rel (0) target = $region17
  $region16: #{weighted_bce_loss.1} parent=0 // pred_region
    _
  $region17: #{weighted_bce_loss.1} parent=0 // pred_fallthru
    _
  // Predicated region
  $region18: #{weighted_bce_loss.1} parent=0 // pred_check
    _
  $region19: #{weighted_bce_loss.1} parent=0 // pred_check_branch
    %124 = sbr.rel (0) target = $region21
  $region20: #{weighted_bce_loss.1} parent=0 // pred_region
    _
  $region21: #{weighted_bce_loss.1} parent=0 // pred_fallthru
    _
  // Predicated region
  $region22: #{weighted_bce_loss.1} parent=0 // pred_check
    _
  $region23: #{weighted_bce_loss.1} parent=0 // pred_check_branch
    %126 = sbr.rel (0) target = $region25
  $region24: #{weighted_bce_loss.1} parent=0 // pred_region
    _
  $region25: #{weighted_bce_loss.1} parent=0 // pred_fallthru
    _
  // Predicated region
  $region26: #{weighted_bce_loss.1} parent=0 // pred_check
    _
  $region27: #{weighted_bce_loss.1} parent=0 // pred_check_branch
    %128 = sbr.rel (0) target = $region29
  $region28: #{weighted_bce_loss.1} parent=0 // pred_region
    _
  $region29: #{weighted_bce_loss.1} parent=0 // pred_fallthru
    _

</llo_original>
